<compile_context>
chip_gen: v5e
topology: v5e:2x2
jax: 0.10.0
libtpu: 0.0.40
codegen_flags: <defaults>
</compile_context>

<pallas_src>
import jax
import jax.numpy as jnp
from jax.experimental import pallas as pl
from jax.experimental.pallas import tpu as pltpu

# EPSILON_FP16 as used by the source repo: torch.finfo(torch.float16).eps == 2**-10.
EPSILON_FP16 = 9.765625e-4

_TILE_BUDGET_BYTES = 6 * 1024 * 1024   # per input tile (Pallas double-buffers it)
_MIN_TILE_BYTES = 1 * 1024 * 1024      # grow TB past the MXU edge until tiles reach ~1 MiB
_MAX_GRAM_EDGE_FACTOR = 2              # ...but never let K = N*TB exceed 2x the MXU edge


def _round_up(x, m):
    return ((x + m - 1) // m) * m


def _target_gram_edge():
    """MXU edge target for the fused Gram: 256 fills v6e/v7x, 128 fills v5e."""
    try:
        info = pltpu.get_tpu_info()
        if "5" in str(getattr(info, "chip_version", "")):
            return 128
    except Exception:
        pass
    return 256


def _pick_tb(batch, n_masks, n_patches, gram_edge):
    """Power-of-two batch-tile size (sublane-aligned, >= 8).

    Doubles TB while it (a) fits the per-tile VMEM budget, (b) does not pad far past
    the batch, and (c) keeps the fused Gram edge K = N*TB at/below the MXU edge
    (allowed up to 2x the edge while tiles are still tiny, to amortize the ~0.35us
    per-grid-step overhead).  Finally prefers >= 2 grid blocks so the "parallel" grid
    axis can shard across v7x's two TensorCores.
    """
    per_b_bytes = n_masks * n_patches * 4
    batch8 = _round_up(batch, 8)
    tb = 8
    while True:
        nxt = 2 * tb
        if nxt * per_b_bytes > _TILE_BUDGET_BYTES or nxt > batch8:
            break
        k_next = n_masks * nxt
        if k_next > gram_edge and not (tb * per_b_bytes < _MIN_TILE_BYTES
                                       and k_next <= _MAX_GRAM_EDGE_FACTOR * gram_edge):
            break
        tb = nxt
    if tb > 8 and _round_up(batch, tb) // tb < 2:
        tb //= 2
    return tb


def _diversity_kernel(x_ref, out_ref):
    """x_ref:  (N, TB, P) f32 VMEM tile — TB batch elements in the natural (N, B, P) layout.
    out_ref: (1, 1, 128) f32 VMEM block — lane-dense partial sum of squared diffs."""
    n, tb, p = x_ref.shape
    k = n * tb

    # (N, TB, P) -> (K, P): merging the two leading (non-lane) dims is a free relayout
    # because TB is a multiple of 8 (sublane aligned).  Row r holds mask (r // TB) of
    # batch element (r % TB).
    x = x_ref[...].reshape(k, p)

    # One fused block-diagonal Gram sized toward the MXU edge, contracting the last
    # dims of both operands (no explicit transpose).  DEFAULT precision: a single
    # bf16 MXU pass keeps the kernel HBM-bound on all generations.
    tops = jax.lax.dot_general(
        x, x,
        dimension_numbers=(((1,), (1,)), ((), ())),
        preferred_element_type=jnp.float32,
    )  # (K, K)

    row = jax.lax.broadcasted_iota(jnp.int32, (k, k), 0)
    col = jax.lax.broadcasted_iota(jnp.int32, (k, k), 1)
    eye = (row == col).astype(jnp.float32)
    # Same-batch mask: rows r, c belong to the same batch element iff r % TB == c % TB.
    # TB is a power of two, so the modulo is a bitwise AND (no vector int divide).
    same_batch = ((row ^ col) & (tb - 1)) == 0

    # Squared norms straight from the Gram diagonal: single masked multiply reused for
    # both the lane (axis=1) and sublane (axis=0) reduction, one sqrt per direction.
    diag = tops * eye
    sumsq_col = jnp.sum(diag, axis=1, keepdims=True)   # (K, 1)
    sumsq_row = jnp.sum(diag, axis=0, keepdims=True)   # (1, K)
    bottoms = jnp.sqrt(sumsq_col) * jnp.sqrt(sumsq_row) + EPSILON_FP16

    # EUP reciprocal (otherwise idle slot); cross-batch entries are masked out, so the
    # block-diagonal sum equals the per-batch (I - tops/bottoms)^2 sums exactly.
    ratio = tops * pl.reciprocal(bottoms, approx=True)
    diff = jnp.where(same_batch, eye - ratio, 0.0)
    total = jnp.sum(diff * diff)

    # Lane-dense broadcast store of the block's partial sum; normalisation (and the
    # padding correction) happen in the wrapper — no serial accumulator, grid axis
    # stays "parallel".
    out_ref[...] = jnp.full(out_ref.shape, total, dtype=out_ref.dtype)


def diversity_loss(masks):
    """masks: (n_masks, batch, n_patches, 1) — same convention as the PyTorch module."""
    n_masks, batch, n_patches, _ = masks.shape

    # 'n b p 1 -> n b p': squeezing the trailing size-1 dim is metadata-only (no HBM
    # pass); the kernel consumes the natural (N, B, P) layout directly.
    # NOTE: streaming stays f32 — casting to bf16 in the wrapper would cost an extra
    # HBM read+write and lose the bandwidth it saves.
    x = masks.reshape(n_masks, batch, n_patches).astype(jnp.float32)

    tb = _pick_tb(batch, n_masks, n_patches, _target_gram_edge())
    batch_padded = _round_up(batch, tb)
    n_pad = batch_padded - batch
    if n_pad:
        # Zero-pad the batch to a multiple of TB (sublane aligned).  Each all-zero
        # padded element contributes exactly N to the block-diagonal diff^2 sum
        # (tops = 0, bottoms = EPS, so the identity rows survive); subtracted below.
        x = jnp.pad(x, ((0, 0), (0, n_pad), (0, 0)))
    num_blocks = batch_padded // tb

    partials = pl.pallas_call(
        _diversity_kernel,
        out_shape=jax.ShapeDtypeStruct((num_blocks, 1, 128), jnp.float32),
        grid_spec=pltpu.PrefetchScalarGridSpec(
            num_scalar_prefetch=0,
            grid=(num_blocks,),
            in_specs=[pl.BlockSpec((n_masks, tb, n_patches), lambda b: (0, b, 0))],
            out_specs=pl.BlockSpec((1, 1, 128), lambda b: (b, 0, 0)),
        ),
        compiler_params=pltpu.CompilerParams(
            dimension_semantics=("parallel",),      # independent per-block outputs
            vmem_limit_bytes=32 * 1024 * 1024,      # <= v7x 64 MiB physical VMEM
        ),
    )(x)

    # partial[b] = sum_{batch elems in block b} sum_{n,m} diff^2  (+ N per padded elem)
    # loss = sum(partials) minus the padded contribution, over (batch * N * N).
    total = jnp.sum(partials[:, 0, 0]) - jnp.float32(n_pad * n_masks)
    return total / jnp.float32(batch * n_masks * n_masks)


def _diversity_loss_ref(masks):
    """Pure-JAX f32 (HIGHEST precision) reference mirroring the PyTorch forward."""
    x = jnp.transpose(masks[..., 0], (1, 0, 2)).astype(jnp.float32)  # (b, n, p)
    norms = jnp.linalg.norm(x, axis=2)                               # (b, n)
    identity = jnp.eye(x.shape[1], dtype=jnp.float32)
    tops = jnp.einsum('bnp,bmp->bnm', x, x, precision=jax.lax.Precision.HIGHEST)
    bottoms = jnp.einsum('bn,bm->bnm', norms, norms) + EPSILON_FP16
    loss = jnp.mean((identity - tops / bottoms) ** 2, axis=(1, 2))
    return jnp.mean(loss)


if __name__ == "__main__":
    key = jax.random.PRNGKey(0)
    k1, k2, k3 = jax.random.split(key, 3)

    # Tolerance: the kernel uses a single-pass bf16 MXU Gram and an EUP approximate
    # reciprocal (~1e-4 relative each); 2e-3 gives a comfortable margin while still
    # catching any structural error (which would be O(0.1)).
    ATOL = RTOL = 2e-3

    # Test 1: module-convention shapes (n_masks, batch, n_patches, 1); tiny batch
    # exercises the zero-pad path (batch 2 -> one sublane-aligned tile of 8).
    m1 = jax.random.uniform(k1, (8, 2, 16, 1), dtype=jnp.float32)
    o1 = jax.block_until_ready(diversity_loss(m1))
    r1 = _diversity_loss_ref(m1)
    assert jnp.allclose(o1, r1, atol=ATOL, rtol=RTOL), (o1, r1)

    # Test 2: two "parallel" grid blocks (TB=16), fused 64x64 block-diagonal Gram.
    m2 = jax.random.uniform(k2, (4, 32, 128, 1), dtype=jnp.float32)
    o2 = jax.block_until_ready(diversity_loss(m2))
    r2 = _diversity_loss_ref(m2)
    assert jnp.allclose(o2, r2, atol=ATOL, rtol=RTOL), (o2, r2)

    # Test 3: batch not a multiple of the tile -> padding + exact pad-correction path.
    m3 = jax.random.uniform(k3, (6, 10, 256, 1), dtype=jnp.float32)
    o3 = jax.block_until_ready(diversity_loss(m3))
    r3 = _diversity_loss_ref(m3)
    assert jnp.allclose(o3, r3, atol=ATOL, rtol=RTOL), (o3, r3)

    print("KERNEL_OK")
</pallas_src>

<mosaic_0001>
module attributes {stable_mosaic.version = 11 : i64} {
  func.func @_diversity_kernel(%arg0: i32, %arg1: memref<8x8x16xf32, #tpu.memory_space<vmem>>, %arg2: memref<1x1x128xf32, #tpu.memory_space<vmem>>) attributes {dimension_semantics = [#tpu.dimension_semantics<parallel>], iteration_bounds = array<i64: 1>, scalar_prefetch = 0 : i64, scratch_operands = 0 : i64, tpu.core_type = #tpu.core_type<tc>, window_params = [{transform_indices = @transform_0, window_bounds = array<i64: 8, 8, 16>}, {transform_indices = @transform_1, window_bounds = array<i64: 1, 1, 128>}]} {
    %c0 = arith.constant 0 : index
    %c0_0 = arith.constant 0 : index
    %c0_1 = arith.constant 0 : index
    %0 = vector.load %arg1[%c0, %c0_0, %c0_1] : memref<8x8x16xf32, #tpu.memory_space<vmem>>, vector<8x8x16xf32>
    %1 = vector.shape_cast %0 : vector<8x8x16xf32> to vector<64x16xf32>
    %cst = arith.constant dense<0.000000e+00> : vector<64x64xf32>
    %2 = tpu.matmul %1, %1, %cst {dimension_numbers = #tpu.dot_dimension_numbers<[1], [1], [0], [0], [0, 0, 1, 0], [], []>} : vector<64x16xf32>, vector<64x16xf32>, vector<64x64xf32> -> vector<64x64xf32>
    %3 = tpu.iota {dimensions = array<i32: 0>} : vector<64x64xi32>
    %4 = tpu.iota {dimensions = array<i32: 1>} : vector<64x64xi32>
    %5 = arith.cmpi eq, %3, %4 : vector<64x64xi32>
    %6 = arith.extui %5 : vector<64x64xi1> to vector<64x64xi32>
    %7 = arith.sitofp %6 : vector<64x64xi32> to vector<64x64xf32>
    %8 = arith.xori %3, %4 : vector<64x64xi32>
    %c7_i32 = arith.constant 7 : i32
    %9 = vector.broadcast %c7_i32 : i32 to vector<64x64xi32>
    %10 = arith.andi %8, %9 : vector<64x64xi32>
    %c0_i32 = arith.constant 0 : i32
    %11 = vector.broadcast %c0_i32 : i32 to vector<64x64xi32>
    %12 = arith.cmpi eq, %10, %11 : vector<64x64xi32>
    %13 = arith.mulf %2, %7 : vector<64x64xf32>
    %cst_2 = arith.constant dense<0.000000e+00> : vector<64xf32>
    %14 = vector.multi_reduction <add>, %13, %cst_2 [1] : vector<64x64xf32> to vector<64xf32>
    %15 = vector.shape_cast %14 : vector<64xf32> to vector<64x1xf32>
    %cst_3 = arith.constant dense<0.000000e+00> : vector<64xf32>
    %16 = vector.multi_reduction <add>, %13, %cst_3 [0] : vector<64x64xf32> to vector<64xf32>
    %17 = vector.shape_cast %16 : vector<64xf32> to vector<1x64xf32>
    %18 = math.sqrt %15 : vector<64x1xf32>
    %19 = math.sqrt %17 : vector<1x64xf32>
    %20 = vector.broadcast %18 : vector<64x1xf32> to vector<64x64xf32>
    %21 = vector.broadcast %19 : vector<1x64xf32> to vector<64x64xf32>
    %22 = arith.mulf %20, %21 : vector<64x64xf32>
    %cst_4 = arith.constant 9.765625E-4 : f32
    %23 = vector.broadcast %cst_4 : f32 to vector<64x64xf32>
    %24 = arith.addf %22, %23 : vector<64x64xf32>
    %25 = tpu.reciprocal %24 {approx = true} : vector<64x64xf32> -> vector<64x64xf32>
    %26 = arith.mulf %2, %25 : vector<64x64xf32>
    %27 = arith.subf %7, %26 : vector<64x64xf32>
    %cst_5 = arith.constant 0.000000e+00 : f32
    %28 = vector.broadcast %cst_5 : f32 to vector<64x64xf32>
    %29 = arith.select %12, %27, %28 : vector<64x64xi1>, vector<64x64xf32>
    %30 = arith.mulf %29, %29 : vector<64x64xf32>
    %31 = vector.shape_cast %30 : vector<64x64xf32> to vector<1x64x64xf32>
    %cst_6 = arith.constant dense<0.000000e+00> : vector<1xf32>
    %32 = vector.multi_reduction <add>, %31, %cst_6 [1, 2] : vector<1x64x64xf32> to vector<1xf32>
    %33 = vector.shape_cast %32 : vector<1xf32> to vector<1x1x1xf32>
    %34 = vector.extract %33[0, 0, 0] : f32 from vector<1x1x1xf32>
    %35 = vector.broadcast %34 : f32 to vector<1x1x128xf32>
    %c0_7 = arith.constant 0 : index
    %c0_8 = arith.constant 0 : index
    %c0_9 = arith.constant 0 : index
    %36 = vector.load %arg2[%c0_7, %c0_8, %c0_9] : memref<1x1x128xf32, #tpu.memory_space<vmem>>, vector<1x1x128xf32>
    tpu.vector_store %arg2[%c0_7, %c0_8, %c0_9], %35 {strides = array<i32>} : memref<1x1x128xf32, #tpu.memory_space<vmem>>, vector<1x1x128xf32>,
    return
  }
  func.func @transform_0(%arg0: i32) -> (i32, i32, i32) {
    %c0_i32 = arith.constant 0 : i32
    %c0_i32_0 = arith.constant 0 : i32
    %c0_i32_1 = arith.constant 0 : i32
    return %c0_i32, %arg0, %c0_i32_0 : i32, i32, i32
  }
  func.func @transform_1(%arg0: i32) -> (i32, i32, i32) {
    %c0_i32 = arith.constant 0 : i32
    %c0_i32_0 = arith.constant 0 : i32
    %c0_i32_1 = arith.constant 0 : i32
    return %arg0, %c0_i32, %c0_i32_0 : i32, i32, i32
  }
}

</mosaic_0001>

<llo_original>
// kernel: tpu_custom_call.1
$region0: #{tpu_custom_call.1}
  #allocation0 [shape = 'u32[]', space=smem, size = 0x4, offset = 0x4, fixed_abs, tag = 'smem constant byte address 0x4 - core index']
  #allocation1 [shape = 'u32[72,128]{1,0:T(1,128)}', space=vmem, size = 0x9000, scoped, tag = 'internal scratch']
  %s0 = inlined_call_operand.hbm [shape: f32[8,8,16], index: 0, kind: input, shape index: {}]
  %s1 = inlined_call_operand.hbm [shape: f32[1,1,128], index: 1, kind: output, shape index: {}]
  %s2 = sld [smem:[#allocation0]]
  $region18: #{tpu_custom_call.1} parent=0
    _
  %s4 = ssub.s32 1, %s2
  %s5 = scalar_select 0, %s4, %s2
  $region1: #{tpu_custom_call.1} parent=0
    #allocation2 [shape = 'u8[32768]{0}', space=vmem, size = 0x8000, scoped, tag = 'input window, operand 0, single buffered']
    #allocation3 [shape = 's32[1]{0}', space=sflag, size = 0x4, scoped, tag = 'scoped memory for tpu_custom_call.1']
    #allocation4 [shape = 's32[1]{0}', space=sflag, size = 0x4, scoped, tag = 'scoped memory for tpu_custom_call.1']
    #allocation5 [shape = 'u8[512]{0}', space=vmem, size = 0x400, scoped, tag = 'output window, operand 0, single buffered']
    %6 = vsyncpa [#allocation3], 0
    %7 = vsyncpa [#allocation4], 0
    // Predicated region
    $region2: #{tpu_custom_call.1} parent=1 // pred_check
      _
    $region3: #{tpu_custom_call.1} parent=1 // pred_check_branch
      %9 = sbr.rel (0) target = $region5
    $region4: #{tpu_custom_call.1} parent=1 // pred_region
      %11 = vsyncadd [#allocation3], 0
      %s12 = sshll.u32 %s0, 4
      %s13 = int_to_ptr.hbm [resolvable:$true] %s12
      %s14 = sshll.u32 [#allocation2], 4
      %s15 = int_to_ptr.vmem [resolvable:$true] %s14
      %20 = dma.hbm_to_vmem [thread:$0]  %s13, 1024, %s15, [#allocation3], 128, 128, 8
    $region5: #{tpu_custom_call.1} parent=1 // pred_fallthru
      _
    // Predicated region
    $region6: #{tpu_custom_call.1} parent=1 // pred_check
      _
    $region7: #{tpu_custom_call.1} parent=1 // pred_check_branch
      %22 = sbr.rel (0) target = $region9
    $region8: #{tpu_custom_call.1} parent=1 // pred_region
      %24 = dma.done [#allocation3], 1024
    $region9: #{tpu_custom_call.1} parent=1 // pred_fallthru
      _
    %v25 = vld [vmem:[#allocation2] sm:$0xff]
    %v26 = vld [vmem:[#allocation2 + $0x8] sm:$0xff]
    %v27 = vld [vmem:[#allocation2 + $0x10] sm:$0xff]
    %v28 = vld [vmem:[#allocation2 + $0x18] sm:$0xff]
    %v29 = vld [vmem:[#allocation2 + $0x20] sm:$0xff]
    %v30 = vld [vmem:[#allocation2 + $0x28] sm:$0xff]
    %v31 = vld [vmem:[#allocation2 + $0x30] sm:$0xff]
    %v32 = vld [vmem:[#allocation2 + $0x38] sm:$0xff]
    %vm33 = vcmask 130048
    %v35 = vsel %vm33, %v25, 0
    %v38 = vsel %vm33, %v26, 0
    %v41 = vsel %vm33, %v27, 0
    %v44 = vsel %vm33, %v28, 0
    %v47 = vsel %vm33, %v29, 0
    %v50 = vsel %vm33, %v30, 0
    %v53 = vsel %vm33, %v31, 0
    %v56 = vsel %vm33, %v32, 0
    %58 = vmatpush.xpose.msra.mxu0 0.0
    %59 = vmatpush.xpose.msra.mxu0 0.0
    %60 = vmatpush.xpose.msra.mxu0 0.0
    %61 = vmatpush.xpose.msra.mxu0 0.0
    %62 = vmatpush.xpose.msra.mxu0 0.0
    %63 = vmatpush.xpose.msra.mxu0 0.0
    %64 = vmatpush.xpose.msra.mxu0 0.0
    %65 = vmatpush.xpose.msra.mxu0 0.0
    %66 = vmatpush.xpose.msra.mxu0 %v56
    %67 = vmatpush.xpose.msra.mxu0 %v53
    %68 = vmatpush.xpose.msra.mxu0 %v50
    %69 = vmatpush.xpose.msra.mxu0 %v47
    %70 = vmatpush.xpose.msra.mxu0 %v44
    %71 = vmatpush.xpose.msra.mxu0 %v41
    %72 = vmatpush.xpose.msra.mxu0 %v38
    %73 = vmatpush.xpose.msra.mxu0 %v35
    %74 = vmatmul.f32.gmra.mxu0 %v35
    %v75 = vpop.f32.mrf.mxu0
    %v76 = vadd.f32 0.0, %v75
    %77 = vmatmul.f32.gmra.mxu0 %v38
    %v78 = vpop.f32.mrf.mxu0
    %v79 = vadd.f32 0.0, %v78
    %80 = vmatmul.f32.gmra.mxu0 %v41
    %v81 = vpop.f32.mrf.mxu0
    %v82 = vadd.f32 0.0, %v81
    %83 = vmatmul.f32.gmra.mxu0 %v44
    %v84 = vpop.f32.mrf.mxu0
    %v85 = vadd.f32 0.0, %v84
    %86 = vmatmul.f32.gmra.mxu0 %v47
    %v87 = vpop.f32.mrf.mxu0
    %v88 = vadd.f32 0.0, %v87
    %89 = vmatmul.f32.gmra.mxu0 %v50
    %v90 = vpop.f32.mrf.mxu0
    %v91 = vadd.f32 0.0, %v90
    %92 = vmatmul.f32.gmra.mxu0 %v53
    %v93 = vpop.f32.mrf.mxu0
    %v94 = vadd.f32 0.0, %v93
    %95 = vmatmul.f32.gmra.mxu0 %v56
    %v96 = vpop.f32.mrf.mxu0
    %v97 = vadd.f32 0.0, %v96
    %98 = vdwg.mxu0
    %v99 = vlaneseq
    %v100 = vshrl.u32 %v99, 7
    %v101 = vadd.s32 %v100, 8
    %v102 = vadd.s32 %v100, 16
    %v103 = vadd.s32 %v100, 24
    %v104 = vadd.s32 %v100, 32
    %v105 = vadd.s32 %v100, 40
    %v106 = vadd.s32 %v100, 48
    %v107 = vadd.s32 %v100, 56
    %v108 = vlaneseq
    %v109 = vand.u32 %v108, 127
    %vm110 = vcmp.eq.s32.totalorder %v100, %v109
    %vm111 = vcmp.eq.s32.totalorder %v101, %v109
    %vm112 = vcmp.eq.s32.totalorder %v102, %v109
    %vm113 = vcmp.eq.s32.totalorder %v103, %v109
    %vm114 = vcmp.eq.s32.totalorder %v104, %v109
    %vm115 = vcmp.eq.s32.totalorder %v105, %v109
    %vm116 = vcmp.eq.s32.totalorder %v106, %v109
    %vm117 = vcmp.eq.s32.totalorder %v107, %v109
    %v118 = vsel %vm110, 1, 0
    %v119 = vsel %vm111, 1, 0
    %v120 = vsel %vm112, 1, 0
    %v121 = vsel %vm113, 1, 0
    %v122 = vsel %vm114, 1, 0
    %v123 = vsel %vm115, 1, 0
    %v124 = vsel %vm116, 1, 0
    %v125 = vsel %vm117, 1, 0
    %v126 = vcvt.s32.f32 %v118
    %v127 = vcvt.s32.f32 %v119
    %v128 = vcvt.s32.f32 %v120
    %v129 = vcvt.s32.f32 %v121
    %v130 = vcvt.s32.f32 %v122
    %v131 = vcvt.s32.f32 %v123
    %v132 = vcvt.s32.f32 %v124
    %v133 = vcvt.s32.f32 %v125
    %v134 = vxor.u32 %v100, %v109
    %v135 = vxor.u32 %v101, %v109
    %v136 = vxor.u32 %v102, %v109
    %v137 = vxor.u32 %v103, %v109
    %v138 = vxor.u32 %v104, %v109
    %v139 = vxor.u32 %v105, %v109
    %v140 = vxor.u32 %v106, %v109
    %v141 = vxor.u32 %v107, %v109
    %v142 = vand.u32 %v134, 7
    %v143 = vand.u32 %v135, 7
    %v144 = vand.u32 %v136, 7
    %v145 = vand.u32 %v137, 7
    %v146 = vand.u32 %v138, 7
    %v147 = vand.u32 %v139, 7
    %v148 = vand.u32 %v140, 7
    %v149 = vand.u32 %v141, 7
    %vm150 = vcmp.eq.s32.totalorder %v142, 0
    %vm151 = vcmp.eq.s32.totalorder %v143, 0
    %vm152 = vcmp.eq.s32.totalorder %v144, 0
    %vm153 = vcmp.eq.s32.totalorder %v145, 0
    %vm154 = vcmp.eq.s32.totalorder %v146, 0
    %vm155 = vcmp.eq.s32.totalorder %v147, 0
    %vm156 = vcmp.eq.s32.totalorder %v148, 0
    %vm157 = vcmp.eq.s32.totalorder %v149, 0
    %v158 = vmul.f32 %v76, %v126
    %v159 = vmul.f32 %v79, %v127
    %v160 = vmul.f32 %v82, %v128
    %v161 = vmul.f32 %v85, %v129
    %v162 = vmul.f32 %v88, %v130
    %v163 = vmul.f32 %v91, %v131
    %v164 = vmul.f32 %v94, %v132
    %v165 = vmul.f32 %v97, %v133
    %vm166 = vcmask 523264
    %v167 = vsel %vm166, %v158, 0.0
    %168 = vadd.xlane.f32.xlu0 %v167
    %v169 = vpop.xlane.xlu0 %168
    %v170 = vsel %vm166, %v159, 0.0
    %171 = vadd.xlane.f32.xlu0 %v170
    %v172 = vpop.xlane.xlu0 %171
    %v173 = vsel %vm166, %v160, 0.0
    %174 = vadd.xlane.f32.xlu0 %v173
    %v175 = vpop.xlane.xlu0 %174
    %v176 = vsel %vm166, %v161, 0.0
    %177 = vadd.xlane.f32.xlu0 %v176
    %v178 = vpop.xlane.xlu0 %177
    %v179 = vsel %vm166, %v162, 0.0
    %180 = vadd.xlane.f32.xlu0 %v179
    %v181 = vpop.xlane.xlu0 %180
    %v182 = vsel %vm166, %v163, 0.0
    %183 = vadd.xlane.f32.xlu0 %v182
    %v184 = vpop.xlane.xlu0 %183
    %v185 = vsel %vm166, %v164, 0.0
    %186 = vadd.xlane.f32.xlu0 %v185
    %v187 = vpop.xlane.xlu0 %186
    %v188 = vsel %vm166, %v165, 0.0
    %189 = vadd.xlane.f32.xlu0 %v188
    %v190 = vpop.xlane.xlu0 %189
    %v191 = vadd.f32 %v167, %v170
    %v192 = vadd.f32 %v191, %v173
    %v193 = vadd.f32 %v192, %v176
    %v194 = vadd.f32 %v193, %v179
    %v195 = vadd.f32 %v194, %v182
    %v196 = vadd.f32 %v195, %v185
    %v197 = vadd.f32 %v196, %v188
    %v198 = vrot.slane %v197, 4
    %v199 = vadd.f32 %v197, %v198
    %v200 = vrot.slane %v199, 2
    %v201 = vadd.f32 %v199, %v200
    %v202 = vrot.slane %v201, 1
    %v203 = vadd.f32 %v201, %v202
    %v204 = vrsqrt.pop %v169
    %v205 = vmul.f32 %v204, %v169
    %v206 = vmul.f32 %v205, %v204
    %v207 = vmul.f32 0.5, %v206
    %v208 = vsub.f32 1.5, %v207
    %v209 = vmul.f32 %v204, %v208
    %v210 = vmul.f32 %v169, %v209
    %vm211 = vcmp.eq.f32.partialorder %v169, inf
    %v212 = vsel %vm211, %v169, %v210
    %vm213 = vcmp.eq.f32.partialorder %v169, 0.0
    %v214 = vand.u32 %v169, 2147483648
    %v215 = vsel %vm213, %v214, %v212
    %v216 = vrsqrt.pop %v172
    %v217 = vmul.f32 %v216, %v172
    %v218 = vmul.f32 %v217, %v216
    %v219 = vmul.f32 0.5, %v218
    %v220 = vsub.f32 1.5, %v219
    %v221 = vmul.f32 %v216, %v220
    %v222 = vmul.f32 %v172, %v221
    %vm223 = vcmp.eq.f32.partialorder %v172, inf
    %v224 = vsel %vm223, %v172, %v222
    %vm225 = vcmp.eq.f32.partialorder %v172, 0.0
    %v226 = vand.u32 %v172, 2147483648
    %v227 = vsel %vm225, %v226, %v224
    %v228 = vrsqrt.pop %v175
    %v229 = vmul.f32 %v228, %v175
    %v230 = vmul.f32 %v229, %v228
    %v231 = vmul.f32 0.5, %v230
    %v232 = vsub.f32 1.5, %v231
    %v233 = vmul.f32 %v228, %v232
    %v234 = vmul.f32 %v175, %v233
    %vm235 = vcmp.eq.f32.partialorder %v175, inf
    %v236 = vsel %vm235, %v175, %v234
    %vm237 = vcmp.eq.f32.partialorder %v175, 0.0
    %v238 = vand.u32 %v175, 2147483648
    %v239 = vsel %vm237, %v238, %v236
    %v240 = vrsqrt.pop %v178
    %v241 = vmul.f32 %v240, %v178
    %v242 = vmul.f32 %v241, %v240
    %v243 = vmul.f32 0.5, %v242
    %v244 = vsub.f32 1.5, %v243
    %v245 = vmul.f32 %v240, %v244
    %v246 = vmul.f32 %v178, %v245
    %vm247 = vcmp.eq.f32.partialorder %v178, inf
    %v248 = vsel %vm247, %v178, %v246
    %vm249 = vcmp.eq.f32.partialorder %v178, 0.0
    %v250 = vand.u32 %v178, 2147483648
    %v251 = vsel %vm249, %v250, %v248
    %v252 = vrsqrt.pop %v181
    %v253 = vmul.f32 %v252, %v181
    %v254 = vmul.f32 %v253, %v252
    %v255 = vmul.f32 0.5, %v254
    %v256 = vsub.f32 1.5, %v255
    %v257 = vmul.f32 %v252, %v256
    %v258 = vmul.f32 %v181, %v257
    %vm259 = vcmp.eq.f32.partialorder %v181, inf
    %v260 = vsel %vm259, %v181, %v258
    %vm261 = vcmp.eq.f32.partialorder %v181, 0.0
    %v262 = vand.u32 %v181, 2147483648
    %v263 = vsel %vm261, %v262, %v260
    %v264 = vrsqrt.pop %v184
    %v265 = vmul.f32 %v264, %v184
    %v266 = vmul.f32 %v265, %v264
    %v267 = vmul.f32 0.5, %v266
    %v268 = vsub.f32 1.5, %v267
    %v269 = vmul.f32 %v264, %v268
    %v270 = vmul.f32 %v184, %v269
    %vm271 = vcmp.eq.f32.partialorder %v184, inf
    %v272 = vsel %vm271, %v184, %v270
    %vm273 = vcmp.eq.f32.partialorder %v184, 0.0
    %v274 = vand.u32 %v184, 2147483648
    %v275 = vsel %vm273, %v274, %v272
    %v276 = vrsqrt.pop %v187
    %v277 = vmul.f32 %v276, %v187
    %v278 = vmul.f32 %v277, %v276
    %v279 = vmul.f32 0.5, %v278
    %v280 = vsub.f32 1.5, %v279
    %v281 = vmul.f32 %v276, %v280
    %v282 = vmul.f32 %v187, %v281
    %vm283 = vcmp.eq.f32.partialorder %v187, inf
    %v284 = vsel %vm283, %v187, %v282
    %vm285 = vcmp.eq.f32.partialorder %v187, 0.0
    %v286 = vand.u32 %v187, 2147483648
    %v287 = vsel %vm285, %v286, %v284
    %v288 = vrsqrt.pop %v190
    %v289 = vmul.f32 %v288, %v190
    %v290 = vmul.f32 %v289, %v288
    %v291 = vmul.f32 0.5, %v290
    %v292 = vsub.f32 1.5, %v291
    %v293 = vmul.f32 %v288, %v292
    %v294 = vmul.f32 %v190, %v293
    %vm295 = vcmp.eq.f32.partialorder %v190, inf
    %v296 = vsel %vm295, %v190, %v294
    %vm297 = vcmp.eq.f32.partialorder %v190, 0.0
    %v298 = vand.u32 %v190, 2147483648
    %v299 = vsel %vm297, %v298, %v296
    %v300 = vrsqrt.pop %v203
    %v301 = vmul.f32 %v300, %v203
    %v302 = vmul.f32 %v301, %v300
    %v303 = vmul.f32 0.5, %v302
    %v304 = vsub.f32 1.5, %v303
    %v305 = vmul.f32 %v300, %v304
    %v306 = vmul.f32 %v203, %v305
    %vm307 = vcmp.eq.f32.partialorder %v203, inf
    %v308 = vsel %vm307, %v203, %v306
    %vm309 = vcmp.eq.f32.partialorder %v203, 0.0
    %v310 = vand.u32 %v203, 2147483648
    %v311 = vsel %vm309, %v310, %v308
    %v312 = vmul.f32 %v215, %v311
    %v313 = vmul.f32 %v227, %v311
    %v314 = vmul.f32 %v239, %v311
    %v315 = vmul.f32 %v251, %v311
    %v316 = vmul.f32 %v263, %v311
    %v317 = vmul.f32 %v275, %v311
    %v318 = vmul.f32 %v287, %v311
    %v319 = vmul.f32 %v299, %v311
    %v320 = vadd.f32 %v312, 0.0009765625
    %v321 = vadd.f32 %v313, 0.0009765625
    %v322 = vadd.f32 %v314, 0.0009765625
    %v323 = vadd.f32 %v315, 0.0009765625
    %v324 = vadd.f32 %v316, 0.0009765625
    %v325 = vadd.f32 %v317, 0.0009765625
    %v326 = vadd.f32 %v318, 0.0009765625
    %v327 = vadd.f32 %v319, 0.0009765625
    %v328 = vrcp.pop %v320
    %v329 = vrcp.pop %v321
    %v330 = vrcp.pop %v322
    %v331 = vrcp.pop %v323
    %v332 = vrcp.pop %v324
    %v333 = vrcp.pop %v325
    %v334 = vrcp.pop %v326
    %v335 = vrcp.pop %v327
    %v336 = vmul.f32 %v76, %v328
    %v337 = vmul.f32 %v79, %v329
    %v338 = vmul.f32 %v82, %v330
    %v339 = vmul.f32 %v85, %v331
    %v340 = vmul.f32 %v88, %v332
    %v341 = vmul.f32 %v91, %v333
    %v342 = vmul.f32 %v94, %v334
    %v343 = vmul.f32 %v97, %v335
    %v344 = vsub.f32 %v126, %v336
    %v345 = vsub.f32 %v127, %v337
    %v346 = vsub.f32 %v128, %v338
    %v347 = vsub.f32 %v129, %v339
    %v348 = vsub.f32 %v130, %v340
    %v349 = vsub.f32 %v131, %v341
    %v350 = vsub.f32 %v132, %v342
    %v351 = vsub.f32 %v133, %v343
    %v352 = vsel %vm150, %v344, 0.0
    %v353 = vsel %vm151, %v345, 0.0
    %v354 = vsel %vm152, %v346, 0.0
    %v355 = vsel %vm153, %v347, 0.0
    %v356 = vsel %vm154, %v348, 0.0
    %v357 = vsel %vm155, %v349, 0.0
    %v358 = vsel %vm156, %v350, 0.0
    %v359 = vsel %vm157, %v351, 0.0
    %v360 = vmul.f32 %v352, %v352
    %v361 = vmul.f32 %v353, %v353
    %v362 = vmul.f32 %v354, %v354
    %v363 = vmul.f32 %v355, %v355
    %v364 = vmul.f32 %v356, %v356
    %v365 = vmul.f32 %v357, %v357
    %v366 = vmul.f32 %v358, %v358
    %v367 = vmul.f32 %v359, %v359
    %v368 = vsel %vm166, %v360, 0.0
    %v369 = vsel %vm166, %v361, 0.0
    %v370 = vadd.f32 %v368, %v369
    %v371 = vsel %vm166, %v362, 0.0
    %v372 = vadd.f32 %v370, %v371
    %v373 = vsel %vm166, %v363, 0.0
    %v374 = vadd.f32 %v372, %v373
    %v375 = vsel %vm166, %v364, 0.0
    %v376 = vadd.f32 %v374, %v375
    %v377 = vsel %vm166, %v365, 0.0
    %v378 = vadd.f32 %v376, %v377
    %v379 = vsel %vm166, %v366, 0.0
    %v380 = vadd.f32 %v378, %v379
    %v381 = vsel %vm166, %v367, 0.0
    %v382 = vadd.f32 %v380, %v381
    %383 = vadd.xlane.f32.xlu0 %v382
    %v384 = vpop.xlane.xlu0 %383
    %v385 = vrot.slane %v384, 4
    %v386 = vadd.f32 %v384, %v385
    %v387 = vrot.slane %v386, 2
    %v388 = vadd.f32 %v386, %v387
    %v389 = vrot.slane %v388, 1
    %v390 = vadd.f32 %v388, %v389
    %s391 = vtos %v390
    %v392 = vstv %s391
    %393 = vst [vmem:[#allocation5] sm:$0x1] %v392
    // Predicated region
    $region10: #{tpu_custom_call.1} parent=1 // pred_check
      _
    $region11: #{tpu_custom_call.1} parent=1 // pred_check_branch
      %395 = sbr.rel (0) target = $region13
    $region12: #{tpu_custom_call.1} parent=1 // pred_region
      %397 = vsyncadd [#allocation4], 0
      %s399 = sshll.u32 [#allocation5], 4
      %s400 = int_to_ptr.vmem [resolvable:$true] %s399
      %s401 = sshll.u32 %s1, 4
      %s402 = int_to_ptr.hbm [resolvable:$true] %s401
      %404 = dma.vmem_to_hbm [thread:$0]  %s400, 16, %s402, [#allocation4]
    $region13: #{tpu_custom_call.1} parent=1 // pred_fallthru
      _
    // Predicated region
    $region14: #{tpu_custom_call.1} parent=1 // pred_check
      _
    $region15: #{tpu_custom_call.1} parent=1 // pred_check_branch
      %406 = sbr.rel (0) target = $region17
    $region16: #{tpu_custom_call.1} parent=1 // pred_region
      %408 = dma.done [#allocation4], 16
    $region17: #{tpu_custom_call.1} parent=1 // pred_fallthru
      _
    %409 = vsyncpa [#allocation3], 1
    %410 = vsyncpa [#allocation4], 1

</llo_original>
